<compile_context>
chip_gen: v5e
topology: v5e:2x2
jax: 0.10.0
libtpu: 0.0.40
codegen_flags: <defaults>
</compile_context>

<pallas_src>
from functools import partial

import jax
import jax.numpy as jnp
from jax import lax
from jax.experimental import pallas as pl
from jax.experimental.pallas import tpu as pltpu


_NEG_INF = -1e30  # large finite negative (avoids NaN for fully-masked rows)


def _qkv_proj_kernel(x_ref, w_ref, b_ref, kv_ref):
    """kv = x @ Wq_flat + b  (Q == K == V in the reference module).

    x_ref:  (1, ts, E)    activations (already in MXU dtype)
    w_ref:  (E, H*D)      fused per-head Q weights, head-major along lanes
    b_ref:  (1, H*D) f32  fused per-head Q biases
    kv_ref: (1, ts, H*D)  projected Q/K/V, stored in MXU dtype
    """
    acc = jnp.dot(x_ref[0], w_ref[...], preferred_element_type=jnp.float32)
    kv_ref[0] = (acc + b_ref[...]).astype(kv_ref.dtype)


def _flash_attn_kernel(q_ref, kv_ref, mask_ref, o_ref,
                       m_ref, l_ref, acc_ref, *,
                       num_heads, head_dim, scale, mxu_dtype, approx_recip):
    """One (batch, query-tile, kv-tile) step; all heads fused, online softmax.

    q_ref:    (1, tq, H*D)  query tile of the shared projection
    kv_ref:   (1, tk, H*D)  key/value tile of the same projection
    mask_ref: (tq, tk) i8   1 == masked
    o_ref:    (1, tq, H*D)  output (final concat layout), written at last kv step
    m_ref:    (tq, H)  f32  running per-head row max          (scratch)
    l_ref:    (tq, H)  f32  running per-head softmax denom    (scratch)
    acc_ref:  (tq, H*D) f32 running per-head output accum     (scratch)
    """
    ki = pl.program_id(2)
    nk = pl.num_programs(2)

    @pl.when(ki == 0)
    def _():
        m_ref[...] = jnp.full_like(m_ref, _NEG_INF)
        l_ref[...] = jnp.zeros_like(l_ref)
        acc_ref[...] = jnp.zeros_like(acc_ref)

    # Widen the int8 mask tile to an additive f32 mask once per step.
    mask_add = jnp.where(mask_ref[...] == 1,
                         jnp.float32(_NEG_INF), jnp.float32(0.0))  # (tq, tk)

    q = q_ref[0]    # (tq, H*D) mxu dtype
    kv = kv_ref[0]  # (tk, H*D) mxu dtype

    for h in range(num_heads):  # static unroll, H is small
        lo = h * head_dim
        hi = lo + head_dim
        qh = q[:, lo:hi]        # (tq, D)
        kvh = kv[:, lo:hi]      # (tk, D)  -- K and V are identical

        # scores = q @ k^T without materializing a transpose.
        s = lax.dot_general(qh, kvh, (((1,), (1,)), ((), ())),
                            preferred_element_type=jnp.float32)   # (tq, tk)
        s = s * scale + mask_add

        m_prev = m_ref[:, h:h + 1]                                # (tq, 1)
        l_prev = l_ref[:, h:h + 1]
        m_new = jnp.maximum(m_prev, jnp.max(s, axis=-1, keepdims=True))
        alpha = jnp.exp(m_prev - m_new)
        p = jnp.exp(s - m_new)                                    # f32
        l_ref[:, h:h + 1] = alpha * l_prev + jnp.sum(p, axis=-1, keepdims=True)
        acc_ref[:, lo:hi] = alpha * acc_ref[:, lo:hi] + jnp.dot(
            p.astype(mxu_dtype), kvh, preferred_element_type=jnp.float32)
        m_ref[:, h:h + 1] = m_new

    @pl.when(ki == nk - 1)
    def _():
        if approx_recip:
            inv = pl.reciprocal(l_ref[...], approx=True)   # (tq, H), EUP slot
        else:
            inv = 1.0 / l_ref[...]                         # exact (verification)
        for h in range(num_heads):
            lo = h * head_dim
            hi = lo + head_dim
            acc_ref[:, lo:hi] = acc_ref[:, lo:hi] * inv[:, h:h + 1]
        # Single lane-dense store, already in the final torch.cat layout.
        o_ref[0] = acc_ref[...].astype(o_ref.dtype)


def multi_head_attention(x, attn_mask, wq, bq, *, mxu_dtype=jnp.bfloat16,
                         q_tile=256, kv_tile=256):
    """x: (B,S,E) f32, attn_mask: (S,S) int (1 == masked), wq: (H,E,D), bq: (H,D)."""
    H, E, D = wq.shape
    B, S, _ = x.shape
    HD = H * D
    scale = float(D) ** (-0.5)

    tq = min(q_tile, S)
    tk = min(kv_tile, S)
    assert S % tq == 0 and S % tk == 0, "S must be divisible by the tile sizes"

    # Flatten per-head weights so wq_flat[:, h*D:(h+1)*D] == wq[h]; pre-cast
    # streaming operands to the MXU dtype (bias / accumulation stay f32).
    wq_flat = jnp.transpose(wq, (1, 0, 2)).reshape(E, HD).astype(mxu_dtype)
    bq_flat = bq.reshape(1, HD).astype(jnp.float32)
    x_in = x.astype(mxu_dtype)
    mask_i8 = attn_mask.astype(jnp.int8)

    # ---- Kernel 1: fused Q/K/V projection (computed once, not per q-tile) ----
    kv = pl.pallas_call(
        _qkv_proj_kernel,
        out_shape=jax.ShapeDtypeStruct((B, S, HD), mxu_dtype),
        grid_spec=pltpu.PrefetchScalarGridSpec(
            num_scalar_prefetch=0,
            grid=(B, S // tq),
            in_specs=[
                pl.BlockSpec((1, tq, E), lambda b, i: (b, i, 0)),   # x tile
                pl.BlockSpec((E, HD), lambda b, i: (0, 0)),         # Wq (fused)
                pl.BlockSpec((1, HD), lambda b, i: (0, 0)),         # bq (fused)
            ],
            out_specs=pl.BlockSpec((1, tq, HD), lambda b, i: (b, i, 0)),
        ),
        compiler_params=pltpu.CompilerParams(
            dimension_semantics=("parallel", "parallel")),
    )(x_in, wq_flat, bq_flat)

    # ---- Kernel 2: flash-style attention over the shared projection ----
    kernel = partial(_flash_attn_kernel, num_heads=H, head_dim=D, scale=scale,
                     mxu_dtype=mxu_dtype,
                     approx_recip=(mxu_dtype != jnp.float32))

    itemsize = jnp.dtype(mxu_dtype).itemsize
    vmem_bytes = (
        2 * tq * HD * itemsize                 # q block, double-buffered
        + 2 * tk * HD * itemsize               # kv block, double-buffered
        + 2 * tq * tk * 1                      # int8 mask block
        + 2 * tq * HD * jnp.dtype(x.dtype).itemsize   # output block
        + tq * HD * 4 + 2 * tq * H * 4         # f32 scratch acc / m / l
    )
    vmem_limit = int(min(64 * 2**20, max(16 * 2**20, 2 * vmem_bytes)))

    out = pl.pallas_call(
        kernel,
        out_shape=jax.ShapeDtypeStruct((B, S, HD), x.dtype),
        grid_spec=pltpu.PrefetchScalarGridSpec(
            num_scalar_prefetch=0,
            grid=(B, S // tq, S // tk),
            in_specs=[
                pl.BlockSpec((1, tq, HD), lambda b, qi, ki: (b, qi, 0)),  # Q tile
                pl.BlockSpec((1, tk, HD), lambda b, qi, ki: (b, ki, 0)),  # K/V tile
                pl.BlockSpec((tq, tk), lambda b, qi, ki: (qi, ki)),       # mask i8
            ],
            out_specs=pl.BlockSpec((1, tq, HD), lambda b, qi, ki: (b, qi, 0)),
            scratch_shapes=[
                pltpu.VMEM((tq, H), jnp.float32),    # running max m
                pltpu.VMEM((tq, H), jnp.float32),    # running denom l
                pltpu.VMEM((tq, HD), jnp.float32),   # output accumulator
            ],
        ),
        compiler_params=pltpu.CompilerParams(
            dimension_semantics=("parallel", "parallel", "arbitrary"),
            vmem_limit_bytes=vmem_limit),
    )(kv, kv, mask_i8)
    return out


def _reference(x, attn_mask, wq, bq):
    """Pure-JAX f32 reference mirroring the PyTorch forward pass."""
    H, E, D = wq.shape
    outs = []
    for h in range(H):
        q = x @ wq[h] + bq[h]                              # Q == K == V
        scores = jnp.einsum("bsd,btd->bst", q, q) * (D ** -0.5)
        scores = jnp.where(attn_mask[None] == 1, -jnp.inf, scores)
        probs = jax.nn.softmax(scores, axis=-1)
        outs.append(jnp.einsum("bst,btd->bsd", probs, q))
    return jnp.concatenate(outs, axis=-1)


if __name__ == "__main__":
    # Small deterministic config: embed_dim=32, num_head=4 -> head_dim=8
    B, S, E, H = 2, 8, 32, 4
    D = E // H

    key = jax.random.PRNGKey(0)
    kx, kw, kb = jax.random.split(key, 3)

    x = jax.random.normal(kx, (B, S, E), dtype=jnp.float32)

    # PyTorch nn.Linear default init: U(-1/sqrt(in_features), 1/sqrt(in_features))
    bound = 1.0 / (E ** 0.5)
    wq = jax.random.uniform(kw, (H, E, D), minval=-bound, maxval=bound,
                            dtype=jnp.float32)
    bq = jax.random.uniform(kb, (H, D), minval=-bound, maxval=bound,
                            dtype=jnp.float32)

    # Causal-style mask: 1 (== masked) strictly above the diagonal.
    attn_mask = jnp.triu(jnp.ones((S, S), dtype=jnp.int32), k=1)

    ref = _reference(x, attn_mask, wq, bq)

    # Exact-precision path (f32 MXU operands, exact reciprocal): tight check.
    out_f32 = jax.block_until_ready(
        multi_head_attention(x, attn_mask, wq, bq, mxu_dtype=jnp.float32))
    assert out_f32.shape == (B, S, H * D), out_f32.shape
    assert jnp.allclose(out_f32, ref, atol=5e-3, rtol=5e-3), "f32 mismatch"

    # Performance path (bf16 MXU operands, f32 accumulation / softmax).
    out_bf16 = jax.block_until_ready(
        multi_head_attention(x, attn_mask, wq, bq))
    assert out_bf16.shape == (B, S, H * D), out_bf16.shape
    assert jnp.allclose(out_bf16, ref, atol=5e-2, rtol=5e-2), "bf16 mismatch"

    print("KERNEL_OK")
</pallas_src>

<mosaic_0001>
module attributes {stable_mosaic.version = 11 : i64} {
  func.func @_qkv_proj_kernel(%arg0: i32, %arg1: i32, %arg2: memref<1x8x32xf32, #tpu.memory_space<vmem>>, %arg3: memref<32x32xf32, #tpu.memory_space<vmem>>, %arg4: memref<1x32xf32, #tpu.memory_space<vmem>>, %arg5: memref<1x8x32xf32, #tpu.memory_space<vmem>>) attributes {dimension_semantics = [#tpu.dimension_semantics<parallel>, #tpu.dimension_semantics<parallel>], iteration_bounds = array<i64: 2, 1>, scalar_prefetch = 0 : i64, scratch_operands = 0 : i64, tpu.core_type = #tpu.core_type<tc>, window_params = [{transform_indices = @transform_0, window_bounds = array<i64: 1, 8, 32>}, {pipeline_mode = #tpu.pipeline_mode<synchronous>, transform_indices = @transform_1, window_bounds = array<i64: 32, 32>}, {pipeline_mode = #tpu.pipeline_mode<synchronous>, transform_indices = @transform_2, window_bounds = array<i64: 1, 32>}, {transform_indices = @transform_3, window_bounds = array<i64: 1, 8, 32>}]} {
    %c0 = arith.constant 0 : index
    %c0_0 = arith.constant 0 : index
    %c0_1 = arith.constant 0 : index
    %0 = vector.load %arg2[%c0, %c0_0, %c0_1] : memref<1x8x32xf32, #tpu.memory_space<vmem>>, vector<1x8x32xf32>
    %1 = vector.shape_cast %0 : vector<1x8x32xf32> to vector<8x32xf32>
    %c0_2 = arith.constant 0 : index
    %c0_3 = arith.constant 0 : index
    %2 = vector.load %arg3[%c0_2, %c0_3] : memref<32x32xf32, #tpu.memory_space<vmem>>, vector<32x32xf32>
    %cst = arith.constant dense<0.000000e+00> : vector<8x32xf32>
    %3 = tpu.matmul %1, %2, %cst {dimension_numbers = #tpu.dot_dimension_numbers<[1], [0], [0], [1], [0, 0, 1, 1], [], []>} : vector<8x32xf32>, vector<32x32xf32>, vector<8x32xf32> -> vector<8x32xf32>
    %c0_4 = arith.constant 0 : index
    %c0_5 = arith.constant 0 : index
    %4 = vector.load %arg4[%c0_4, %c0_5] : memref<1x32xf32, #tpu.memory_space<vmem>>, vector<1x32xf32>
    %5 = vector.broadcast %4 : vector<1x32xf32> to vector<8x32xf32>
    %6 = arith.addf %3, %5 : vector<8x32xf32>
    %c0_6 = arith.constant 0 : index
    %c0_7 = arith.constant 0 : index
    %c0_8 = arith.constant 0 : index
    %7 = vector.load %arg5[%c0_6, %c0_7, %c0_8] : memref<1x8x32xf32, #tpu.memory_space<vmem>>, vector<1x8x32xf32>
    %8 = vector.shape_cast %7 : vector<1x8x32xf32> to vector<8x32xf32>
    %9 = vector.shape_cast %6 : vector<8x32xf32> to vector<1x8x32xf32>
    tpu.vector_store %arg5[%c0_6, %c0_7, %c0_8], %9 {strides = array<i32>} : memref<1x8x32xf32, #tpu.memory_space<vmem>>, vector<1x8x32xf32>,
    return
  }
  func.func @transform_0(%arg0: i32, %arg1: i32) -> (i32, i32, i32) {
    %c0_i32 = arith.constant 0 : i32
    %c0_i32_0 = arith.constant 0 : i32
    return %arg0, %arg1, %c0_i32 : i32, i32, i32
  }
  func.func @transform_1(%arg0: i32, %arg1: i32) -> (i32, i32) {
    %c0_i32 = arith.constant 0 : i32
    %c0_i32_0 = arith.constant 0 : i32
    %c0_i32_1 = arith.constant 0 : i32
    return %c0_i32, %c0_i32_0 : i32, i32
  }
  func.func @transform_2(%arg0: i32, %arg1: i32) -> (i32, i32) {
    %c0_i32 = arith.constant 0 : i32
    %c0_i32_0 = arith.constant 0 : i32
    %c0_i32_1 = arith.constant 0 : i32
    return %c0_i32, %c0_i32_0 : i32, i32
  }
  func.func @transform_3(%arg0: i32, %arg1: i32) -> (i32, i32, i32) {
    %c0_i32 = arith.constant 0 : i32
    %c0_i32_0 = arith.constant 0 : i32
    return %arg0, %arg1, %c0_i32 : i32, i32, i32
  }
}

</mosaic_0001>

<llo_original>
// kernel: tpu_custom_call.1
$region0: #{tpu_custom_call.1}
  #allocation0 [shape = 'u32[]', space=smem, size = 0x4, offset = 0x4, fixed_abs, tag = 'smem constant byte address 0x4 - core index']
  #allocation1 [shape = 'u32[72,128]{1,0:T(1,128)}', space=vmem, size = 0x9000, scoped, tag = 'internal scratch']
  %s0 = inlined_call_operand.hbm [shape: f32[2,8,32], index: 0, kind: input, shape index: {}]
  %s1 = inlined_call_operand.hbm [shape: f32[32,32], index: 1, kind: input, shape index: {}]
  %s2 = inlined_call_operand.vmem [shape: f32[1,32], index: 2, kind: input, shape index: {}]
  %s3 = inlined_call_operand.hbm [shape: f32[2,8,32], index: 3, kind: output, shape index: {}]
  %s4 = sld [smem:[#allocation0]]
  $region53: #{tpu_custom_call.1} parent=0
    _
  %s6 = ssub.s32 1, %s4
  %s7 = scalar_select 0, %s6, %s4
  $region1: #{tpu_custom_call.1} parent=0
    #allocation2 [shape = 'u8[8192]{0}', space=vmem, size = 0x2000, scoped, tag = 'input window, operand 0']
    #allocation3 [shape = 's32[2]{0}', space=sflag, size = 0x8, scoped, tag = 'scoped memory for tpu_custom_call.1']
    #allocation4 [shape = 's32[2]{0}', space=sflag, size = 0x8, scoped, tag = 'scoped memory for tpu_custom_call.1']
    #allocation5 [shape = 'u8[16384]{0}', space=vmem, size = 0x4000, scoped, tag = 'input window, operand 1, single buffered']
    #allocation6 [shape = 's32[1]{0}', space=sflag, size = 0x4, scoped, tag = 'scoped memory for tpu_custom_call.1']
    #allocation7 [shape = 'u8[8192]{0}', space=vmem, size = 0x2000, scoped, tag = 'output window, operand 0']
    %8 = vsyncpa [#allocation3], 0
    %s9 = scalar_lea.sflag [#allocation3], 1
    %10 = vsyncpa %s9, 0
    %11 = vsyncpa [#allocation6], 0
    %12 = vsyncpa [#allocation4], 0
    %s13 = scalar_lea.sflag [#allocation4], 1
    %14 = vsyncpa %s13, 0
    loop: start=0, step=1, limit=4
    $region2: #{tpu_custom_call.1} parent=1 // loop_pre_header
      _
    $region3: #{tpu_custom_call.1} parent=1 // loop_header
      %s16 = sphi 0, %s20
      %p17 = scmp.ge.s32.totalorder %s16, 4
      %s23 = sphi 0, %s35
      %s24 = sphi 0, %s31
      %s25 = sphi 0, %s23
      %s26 = sphi 0, %s24
      %s27 = sphi 0, %s25
      %s28 = sphi 0, %s26
      %s40 = sphi 0, %s42
      %s43 = sphi 0, %s40
      %s44 = sphi 0, %s43
      %s60 = sphi 0, %s44
      %s64 = sphi 0, %s64
      %s66 = sphi 0, %s64
      %s67 = sphi 0, %s66
      %s81 = sphi 0, %s67
      %s85 = sphi 0, %s85
      %s87 = sphi 0, %s85
      %s88 = sphi 0, %s87
      %s102 = sphi 0, %s88
      %s110 = sphi 0, %s112
      %s113 = sphi 0, %s110
      %s114 = sphi 0, %s113
      %s130 = sphi 0, %s114
    $region4: #{tpu_custom_call.1} parent=1 // loop_header_branch
      %19 = sbr.rel (%p17) target = $region8
    $region5: #{tpu_custom_call.1} parent=1 // loop_body
      %s21 = ssub.s32 %s16, 1
      %s22 = ssub.s32 %s16, 2
      %s29 = sadd.s32 1, %s24
      %p30 = scmp.ge.s32.totalorder %s29, 1
      %s31 = scalar_select %p30, 0, %s29
      %s32 = sadd.s32 1, %s23
      %s33 = scalar_select %p30, %s32, %s23
      %p34 = scmp.ge.s32.totalorder %s33, 2
      %s35 = scalar_select %p34, 0, %s33
      %s36 = ssub.s32 %s23, %s35
      %s37 = ssub.s32 %s24, %s31
      %s38 = sor.u32 %s36, %s37
      %p39 = scmp.eq.s32.totalorder %s38, 0
      %s41 = sadd.s32 %s40, 1
      %s42 = scalar_select %p39, %s40, %s41
      %p45 = pneg %p39
      %p46 = scmp.eq.s32.totalorder %s16, 1
      %p47 = por %p45, %p46
      %p48 = scmp.ne.s32.totalorder %s40, %s43
      %p49 = scmp.eq.s32.totalorder %s16, 0
      %p50 = por %p48, %p49
      %p51 = scmp.ne.s32.totalorder %s40, %s43
      %p52 = scmp.eq.s32.totalorder %s21, 1
      %p53 = por %p51, %p52
      %p54 = scmp.ne.s32.totalorder %s43, %s44
      %p55 = scmp.eq.s32.totalorder %s21, 0
      %p56 = por %p54, %p55
      %p57 = scmp.ne.s32.totalorder %s43, %s44
      %p58 = scmp.eq.s32.totalorder %s22, 1
      %p59 = por %p57, %p58
      %p61 = scmp.ne.s32.totalorder %s44, %s60
      %p62 = scmp.eq.s32.totalorder %s22, 0
      %p63 = por %p61, %p62
      %s65 = sadd.s32 %s64, 1
      %p68 = scmp.eq.s32.totalorder %s16, 1
      %p69 = scmp.ne.s32.totalorder %s64, %s66
      %p70 = scmp.eq.s32.totalorder %s16, 0
      %p71 = por %p69, %p70
      %p72 = scmp.ne.s32.totalorder %s64, %s66
      %p73 = scmp.eq.s32.totalorder %s21, 1
      %p74 = por %p72, %p73
      %p75 = scmp.ne.s32.totalorder %s66, %s67
      %p76 = scmp.eq.s32.totalorder %s21, 0
      %p77 = por %p75, %p76
      %p78 = scmp.ne.s32.totalorder %s66, %s67
      %p79 = scmp.eq.s32.totalorder %s22, 1
      %p80 = por %p78, %p79
      %p82 = scmp.ne.s32.totalorder %s67, %s81
      %p83 = scmp.eq.s32.totalorder %s22, 0
      %p84 = por %p82, %p83
      %s86 = sadd.s32 %s85, 1
      %p89 = scmp.eq.s32.totalorder %s16, 1
      %p90 = scmp.ne.s32.totalorder %s85, %s87
      %p91 = scmp.eq.s32.totalorder %s16, 0
      %p92 = por %p90, %p91
      %p93 = scmp.ne.s32.totalorder %s85, %s87
      %p94 = scmp.eq.s32.totalorder %s21, 1
      %p95 = por %p93, %p94
      %p96 = scmp.ne.s32.totalorder %s87, %s88
      %p97 = scmp.eq.s32.totalorder %s21, 0
      %p98 = por %p96, %p97
      %p99 = scmp.ne.s32.totalorder %s87, %s88
      %p100 = scmp.eq.s32.totalorder %s22, 1
      %p101 = por %p99, %p100
      %p103 = scmp.ne.s32.totalorder %s88, %s102
      %p104 = scmp.eq.s32.totalorder %s22, 0
      %p105 = por %p103, %p104
      %s106 = ssub.s32 %s23, %s35
      %s107 = ssub.s32 %s24, %s31
      %s108 = sor.u32 %s106, %s107
      %p109 = scmp.eq.s32.totalorder %s108, 0
      %s111 = sadd.s32 %s110, 1
      %s112 = scalar_select %p109, %s110, %s111
      %p115 = pneg %p109
      %p116 = scmp.eq.s32.totalorder %s16, 1
      %p117 = por %p115, %p116
      %p118 = scmp.ne.s32.totalorder %s110, %s113
      %p119 = scmp.eq.s32.totalorder %s16, 0
      %p120 = por %p118, %p119
      %p121 = scmp.ne.s32.totalorder %s110, %s113
      %p122 = scmp.eq.s32.totalorder %s21, 1
      %p123 = por %p121, %p122
      %p124 = scmp.ne.s32.totalorder %s113, %s114
      %p125 = scmp.eq.s32.totalorder %s21, 0
      %p126 = por %p124, %p125
      %p127 = scmp.ne.s32.totalorder %s113, %s114
      %p128 = scmp.eq.s32.totalorder %s22, 1
      %p129 = por %p127, %p128
      %p131 = scmp.ne.s32.totalorder %s114, %s130
      %p132 = scmp.eq.s32.totalorder %s22, 0
      %p133 = por %p131, %p132
      %p134 = scmp.le.s32.totalorder 1, %s16
      %p135 = scmp.lt.s32.totalorder %s16, 3
      %p136 = pnand %p134, %p135
      %p137 = pneg %p136
      // Predicated region
      $region9: #{tpu_custom_call.1} parent=5 // pred_check
        _
      $region10: #{tpu_custom_call.1} parent=5 // pred_check_branch
        %139 = sbr.rel (%p136) target = $region12
      $region11: #{tpu_custom_call.1} parent=5 // pred_region
        %s140 = ssub.s32 %s16, 1
        // Predicated region
        $region13: #{tpu_custom_call.1} parent=11 // pred_check
          %p141 = pneg %p77
        $region14: #{tpu_custom_call.1} parent=11 // pred_check_branch
          %143 = sbr.rel (%p141) target = $region16
        $region15: #{tpu_custom_call.1} parent=11 // pred_region
          %145 = vsyncadd [#allocation6], 0
          %s146 = sshll.u32 %s1, 4
          %s147 = int_to_ptr.hbm [resolvable:$true] %s146
          %s148 = sshll.u32 [#allocation5], 4
          %s149 = int_to_ptr.vmem [resolvable:$true] %s148
          %154 = dma.hbm_to_vmem [thread:$0]  %s147, 512, %s149, [#allocation6], 128, 128, 8
        $region16: #{tpu_custom_call.1} parent=11 // pred_fallthru
          _
        // Predicated region
        $region17: #{tpu_custom_call.1} parent=11 // pred_check
          %p155 = pneg %p98
        $region18: #{tpu_custom_call.1} parent=11 // pred_check_branch
          %157 = sbr.rel (%p155) target = $region20
        $region19: #{tpu_custom_call.1} parent=11 // pred_region
          _
        $region20: #{tpu_custom_call.1} parent=11 // pred_fallthru
          _
      $region12: #{tpu_custom_call.1} parent=5 // pred_fallthru
        _
      %p158 = scmp.lt.s32.totalorder %s16, 2
      // Predicated region
      $region21: #{tpu_custom_call.1} parent=5 // pred_check
        %p159 = pneg %p158
      $region22: #{tpu_custom_call.1} parent=5 // pred_check_branch
        %161 = sbr.rel (%p159) target = $region24
      $region23: #{tpu_custom_call.1} parent=5 // pred_region
        // Predicated region
        $region25: #{tpu_custom_call.1} parent=23 // pred_check
          %p162 = pneg %p50
        $region26: #{tpu_custom_call.1} parent=23 // pred_check_branch
          %164 = sbr.rel (%p162) target = $region28
        $region27: #{tpu_custom_call.1} parent=23 // pred_region
          %s165 = sand.u32 %s40, 1
          %s166 = scalar_lea.sflag [#allocation3], %s165
          %s167 = sand.u32 %s40, 1
          %s168 = smul.addr %s167, 8
          %s169 = scalar_lea.vmem [#allocation2], %s168
          %171 = vsyncadd %s166, 0
          %s172 = sadd.s32 %s24, %s23
          %s173 = smul.addr %s172, 8
          %s174 = scalar_lea.hbm %s0, %s173
          %s176 = sshll.u32 %s174, 4
          %s177 = int_to_ptr.hbm [resolvable:$true] %s176
          %s178 = sshll.u32 %s169, 4
          %s179 = int_to_ptr.vmem [resolvable:$true] %s178
          %181 = dma.hbm_to_vmem [thread:$0]  %s177, 128, %s179, %s166
        $region28: #{tpu_custom_call.1} parent=23 // pred_fallthru
          _
      $region24: #{tpu_custom_call.1} parent=5 // pred_fallthru
        _
      %p182 = scmp.le.s32.totalorder 1, %s16
      %p183 = scmp.lt.s32.totalorder %s16, 3
      %p184 = pnand %p182, %p183
      %p185 = pneg %p184
      // Predicated region
      $region29: #{tpu_custom_call.1} parent=5 // pred_check
        _
      $region30: #{tpu_custom_call.1} parent=5 // pred_check_branch
        %187 = sbr.rel (%p184) target = $region32
      $region31: #{tpu_custom_call.1} parent=5 // pred_region
        %s188 = ssub.s32 %s16, 1
        %s189 = sand.u32 %s43, 1
        %s190 = scalar_lea.sflag [#allocation3], %s189
        %s191 = sand.u32 %s43, 1
        %s192 = smul.addr %s191, 8
        %s193 = scalar_lea.vmem [#allocation2], %s192
        // Predicated region
        $region33: #{tpu_custom_call.1} parent=31 // pred_check
          %p194 = pneg %p56
        $region34: #{tpu_custom_call.1} parent=31 // pred_check_branch
          %196 = sbr.rel (%p194) target = $region36
        $region35: #{tpu_custom_call.1} parent=31 // pred_region
          %198 = dma.done %s190, 128
        $region36: #{tpu_custom_call.1} parent=31 // pred_fallthru
          _
        // Predicated region
        $region37: #{tpu_custom_call.1} parent=31 // pred_check
          %p199 = pneg %p77
        $region38: #{tpu_custom_call.1} parent=31 // pred_check_branch
          %201 = sbr.rel (%p199) target = $region40
        $region39: #{tpu_custom_call.1} parent=31 // pred_region
          %203 = dma.done [#allocation6], 512
        $region40: #{tpu_custom_call.1} parent=31 // pred_fallthru
          _
        %s204 = sand.u32 %s43, 1
        %s205 = scalar_lea.sflag [#allocation3], %s204
        %s206 = sand.u32 %s43, 1
        %s207 = smul.addr %s206, 8
        %s208 = scalar_lea.vmem [#allocation2], %s207
        %p209 = pneg %p56
        %p210 = pneg %p53
        %p211 = pneg %p77
        %p212 = pneg %p74
        %p213 = pneg %p98
        %p214 = pneg %p95
        %p215 = pneg %p126
        %p216 = pneg %p123
        %s217 = sand.u32 %s113, 1
        %s218 = scalar_lea.sflag [#allocation4], %s217
        %s219 = sand.u32 %s113, 1
        %s220 = smul.addr %s219, 8
        %s221 = scalar_lea.vmem [#allocation7], %s220
        %v222 = vld [vmem:[%s193] sm:$0xff]
        %v223 = vld [vmem:[#allocation5] sm:$0xff]
        %v224 = vld [vmem:[#allocation5 + $0x8] sm:$0xff]
        %v225 = vld [vmem:[#allocation5 + $0x10] sm:$0xff]
        %v226 = vld [vmem:[#allocation5 + $0x18] sm:$0xff]
        %v227 = vld [vmem:[%s2] sm:$0x1]
        %v229 = vperm.slane %v227, 0
        %vm231 = vcmask 261120
        %v233 = vsel %vm231, %v222, 0
        %235 = vmatpush.msra.mxu0 0.0
        %236 = vmatpush.msra.mxu0 0.0
        %237 = vmatpush.msra.mxu0 0.0
        %238 = vmatpush.msra.mxu0 0.0
        %239 = vmatpush.msra.mxu0 0.0
        %240 = vmatpush.msra.mxu0 0.0
        %241 = vmatpush.msra.mxu0 0.0
        %242 = vmatpush.msra.mxu0 0.0
        %243 = vmatpush.msra.mxu0 0.0
        %244 = vmatpush.msra.mxu0 0.0
        %245 = vmatpush.msra.mxu0 0.0
        %246 = vmatpush.msra.mxu0 0.0
        %247 = vmatpush.msra.mxu0 %v226
        %248 = vmatpush.msra.mxu0 %v225
        %249 = vmatpush.msra.mxu0 %v224
        %250 = vmatpush.msra.mxu0 %v223
        %251 = vmatmul.f32.gmra.mxu0 %v233
        %v252 = vpop.f32.mrf.mxu0
        %v253 = vadd.f32 %v229, %v252
        %254 = vdwg.mxu0
        %255 = vst.msk [vmem:[%s221] sm:$0xff] %vm231, %v253
        %s256 = sand.u32 %s113, 1
        %s257 = scalar_lea.sflag [#allocation4], %s256
        %s258 = sand.u32 %s113, 1
        %s259 = smul.addr %s258, 8
        %s260 = scalar_lea.vmem [#allocation7], %s259
        // Predicated region
        $region41: #{tpu_custom_call.1} parent=31 // pred_check
          %p261 = pneg %p123
        $region42: #{tpu_custom_call.1} parent=31 // pred_check_branch
          %263 = sbr.rel (%p261) target = $region44
        $region43: #{tpu_custom_call.1} parent=31 // pred_region
          %265 = vsyncadd %s257, 0
          %s266 = sadd.s32 %s26, %s25
          %s267 = smul.addr %s266, 8
          %s268 = scalar_lea.hbm %s3, %s267
          %s270 = sshll.u32 %s260, 4
          %s271 = int_to_ptr.vmem [resolvable:$true] %s270
          %s272 = sshll.u32 %s268, 4
          %s273 = int_to_ptr.hbm [resolvable:$true] %s272
          %275 = dma.vmem_to_hbm [thread:$0]  %s271, 128, %s273, %s257
        $region44: #{tpu_custom_call.1} parent=31 // pred_fallthru
          _
      $region32: #{tpu_custom_call.1} parent=5 // pred_fallthru
        _
      %p276 = scmp.le.s32.totalorder 2, %s16
      // Predicated region
      $region45: #{tpu_custom_call.1} parent=5 // pred_check
        %p277 = pneg %p276
      $region46: #{tpu_custom_call.1} parent=5 // pred_check_branch
        %279 = sbr.rel (%p277) target = $region48
      $region47: #{tpu_custom_call.1} parent=5 // pred_region
        %s280 = ssub.s32 %s16, 2
        // Predicated region
        $region49: #{tpu_custom_call.1} parent=47 // pred_check
          %p281 = pneg %p129
        $region50: #{tpu_custom_call.1} parent=47 // pred_check_branch
          %283 = sbr.rel (%p281) target = $region52
        $region51: #{tpu_custom_call.1} parent=47 // pred_region
          %s284 = sand.u32 %s114, 1
          %s285 = scalar_lea.sflag [#allocation4], %s284
          %s286 = sand.u32 %s114, 1
          %s287 = smul.addr %s286, 8
          %s288 = scalar_lea.vmem [#allocation7], %s287
          %290 = dma.done %s285, 128
        $region52: #{tpu_custom_call.1} parent=47 // pred_fallthru
          _
      $region48: #{tpu_custom_call.1} parent=5 // pred_fallthru
        _
    $region6: #{tpu_custom_call.1} parent=1 // loop_footer
      %s20 = sadd.s32 1, %s16
    $region7: #{tpu_custom_call.1} parent=1 // loop_footer_branch
      %15 = sbr.rel target = $region3
    $region8: #{tpu_custom_call.1} parent=1 // loop_exit
      _
    %291 = vsyncpa [#allocation3], 1
    %s292 = scalar_lea.sflag [#allocation3], 1
    %293 = vsyncpa %s292, 1
    %294 = vsyncpa [#allocation6], 1
    %295 = vsyncpa [#allocation4], 1
    %s296 = scalar_lea.sflag [#allocation4], 1
    %297 = vsyncpa %s296, 1

</llo_original>
